<compile_context>
chip_gen: v7x
topology: tpu7x:2x2x1
jax: 0.10.0
libtpu: 0.0.40
codegen_flags: <defaults>
</compile_context>

<pallas_src>
import math
import functools

import jax
import jax.numpy as jnp
from jax.experimental import pallas as pl
from jax.experimental.pallas import tpu as pltpu


# -----------------------------------------------------------------------------
# Generation-aware tiling / VMEM configuration
# -----------------------------------------------------------------------------
def _vmem_budget():
    """~75% of physical VMEM, capped at 96 MiB (v5e/v6e: 96 MiB, v7x: 48 MiB, unknown: 32 MiB)."""
    try:
        info = pltpu.get_tpu_info()
        cap = getattr(info, "vmem_capacity_bytes", None)
        if cap:
            return min(int(cap) * 3 // 4, 96 * 1024 * 1024)
    except Exception:
        pass
    return 32 * 1024 * 1024


VMEM_LIMIT_BYTES = _vmem_budget()
_BIG_VMEM = VMEM_LIMIT_BYTES >= 64 * 1024 * 1024

# 512-wide output tiles halve A/B re-streaming on the big projections and amortize the
# ~0.35us/grid-step overhead; bf16 operands keep the double-buffered footprint small.
LIN_TM, LIN_TN, LIN_TK = 512, 512, 512
ATTN_TILE_TARGET = 512 if _BIG_VMEM else 256


def _round_up(x, m):
    return ((x + m - 1) // m) * m


def _pick_tile(dim, target, align):
    """Largest tile <= target that divides dim and respects the (8,128) alignment rule.

    Callers pad the row (M) dimension to a multiple of 8, so the full-extent fallback only
    triggers for small / already-whole model dims (D, F, padded vocab, short sequences).
    """
    if dim <= target:
        return dim
    if dim % align != 0:
        return dim
    t = (target // align) * align
    while dim % t:
        t -= align
    return max(t, align)


# -----------------------------------------------------------------------------
# Pallas kernels
# -----------------------------------------------------------------------------
def _matmul_kernel(x_ref, w_ref, b_ref, o_ref, acc_ref, *, activation):
    """Tiled y = x @ w + b (optionally ReLU); bf16 operands, f32 accumulation over K."""
    @pl.when(pl.program_id(2) == 0)
    def _():
        acc_ref[...] = jnp.zeros_like(acc_ref)

    acc_ref[...] += jnp.dot(x_ref[...], w_ref[...], preferred_element_type=jnp.float32)

    @pl.when(pl.program_id(2) == pl.num_programs(2) - 1)
    def _():
        y = acc_ref[...] + b_ref[...]
        if activation == "relu":
            y = jnp.maximum(y, 0.0)
        o_ref[...] = y.astype(o_ref.dtype)


def linear(x, w, b, activation=None, out_dtype=jnp.bfloat16):
    """y = x @ w + b (optional ReLU). x:(M,K) bf16, w:(K,N) bf16 (pre-transposed), b:(N,) f32."""
    M, K = x.shape
    K2, N = w.shape
    assert K == K2
    Mp = _round_up(M, 8)
    if Mp != M:
        x = jnp.pad(x, ((0, Mp - M), (0, 0)))
    tm = _pick_tile(Mp, LIN_TM, 8)
    tn = _pick_tile(N, LIN_TN, 128)
    tk = _pick_tile(K, LIN_TK, 128)
    grid = (Mp // tm, N // tn, K // tk)
    out = pl.pallas_call(
        functools.partial(_matmul_kernel, activation=activation),
        out_shape=jax.ShapeDtypeStruct((Mp, N), out_dtype),
        grid=grid,
        in_specs=[
            pl.BlockSpec((tm, tk), lambda i, j, k: (i, k)),
            pl.BlockSpec((tk, tn), lambda i, j, k: (k, j)),
            pl.BlockSpec((1, tn), lambda i, j, k: (0, j)),
        ],
        out_specs=pl.BlockSpec((tm, tn), lambda i, j, k: (i, j)),
        scratch_shapes=[pltpu.VMEM((tm, tn), jnp.float32)],
        compiler_params=pltpu.CompilerParams(
            dimension_semantics=("parallel", "parallel", "arbitrary"),
            vmem_limit_bytes=VMEM_LIMIT_BYTES),
    )(x, w, b.reshape(1, N))
    return out[:M] if Mp != M else out


def _matmul_ln_kernel(x_ref, w_ref, b_ref, r_ref, g_ref, be_ref, o_ref, acc_ref, *, eps):
    """Tiled y = LayerNorm(x @ w + b + residual); LN fused into the K-loop epilogue (f32)."""
    k = pl.program_id(1)

    @pl.when(k == 0)
    def _():
        acc_ref[...] = jnp.zeros_like(acc_ref)

    acc_ref[...] += jnp.dot(x_ref[...], w_ref[...], preferred_element_type=jnp.float32)

    @pl.when(k == pl.num_programs(1) - 1)
    def _():
        h = acc_ref[...] + b_ref[...] + r_ref[...].astype(jnp.float32)
        mu = jnp.mean(h, axis=-1, keepdims=True)
        var = jnp.mean((h - mu) ** 2, axis=-1, keepdims=True)
        inv = jax.lax.rsqrt(var + eps)
        o_ref[...] = ((h - mu) * inv * g_ref[...] + be_ref[...]).astype(o_ref.dtype)


def linear_add_layernorm(x, w, b, residual, gamma, beta, eps=1e-5, out_dtype=jnp.bfloat16):
    """LayerNorm(x @ w + b + residual). N (= model dim) kept whole so LN stats are exact."""
    M, K = x.shape
    K2, D = w.shape
    assert K == K2 and residual.shape == (M, D)
    Mp = _round_up(M, 8)
    if Mp != M:
        x = jnp.pad(x, ((0, Mp - M), (0, 0)))
        residual = jnp.pad(residual, ((0, Mp - M), (0, 0)))
    tm = _pick_tile(Mp, LIN_TM, 8)
    tk = _pick_tile(K, LIN_TK, 128)
    grid = (Mp // tm, K // tk)
    out = pl.pallas_call(
        functools.partial(_matmul_ln_kernel, eps=eps),
        out_shape=jax.ShapeDtypeStruct((Mp, D), out_dtype),
        grid=grid,
        in_specs=[
            pl.BlockSpec((tm, tk), lambda i, k: (i, k)),
            pl.BlockSpec((tk, D), lambda i, k: (k, 0)),
            pl.BlockSpec((1, D), lambda i, k: (0, 0)),
            pl.BlockSpec((tm, D), lambda i, k: (i, 0)),
            pl.BlockSpec((1, D), lambda i, k: (0, 0)),
            pl.BlockSpec((1, D), lambda i, k: (0, 0)),
        ],
        out_specs=pl.BlockSpec((tm, D), lambda i, k: (i, 0)),
        scratch_shapes=[pltpu.VMEM((tm, D), jnp.float32)],
        compiler_params=pltpu.CompilerParams(
            dimension_semantics=("parallel", "arbitrary"),
            vmem_limit_bytes=VMEM_LIMIT_BYTES),
    )(x, w, b.reshape(1, D), residual, gamma.reshape(1, D), beta.reshape(1, D))
    return out[:M] if Mp != M else out


def _flash_attn_kernel(q_ref, k_ref, v_ref, o_ref, m_ref, l_ref, acc_ref,
                       *, num_heads, head_dim, causal, tq, tkv):
    """Online-softmax attention over one (batch, q-block); heads handled via lane slices.

    q/k/v blocks are (1, tile, D) bf16 (softmax scale pre-folded into Q); the output block is
    written lane-dense as (1, tq, D).  Causal masking is applied only on diagonal kv blocks;
    fully-future blocks are skipped (and their K/V DMA is elided by the clamped index_map).
    """
    qi = pl.program_id(1)
    ki = pl.program_id(2)

    @pl.when(ki == 0)
    def _():
        m_ref[...] = jnp.full_like(m_ref, -1e30)
        l_ref[...] = jnp.zeros_like(l_ref)
        acc_ref[...] = jnp.zeros_like(acc_ref)

    def compute(use_mask):
        q = q_ref[0]   # (tq, D)  bf16
        k = k_ref[0]   # (tkv, D) bf16
        v = v_ref[0]   # (tkv, D) bf16
        if use_mask:
            q_pos = qi * tq + jax.lax.broadcasted_iota(jnp.int32, (tq, tkv), 0)
            k_pos = ki * tkv + jax.lax.broadcasted_iota(jnp.int32, (tq, tkv), 1)
            neg = jnp.where(k_pos > q_pos, jnp.float32(-1e30), jnp.float32(0.0))
        for h in range(num_heads):
            sl = slice(h * head_dim, (h + 1) * head_dim)
            s = jax.lax.dot_general(q[:, sl], k[:, sl], (((1,), (1,)), ((), ())),
                                    preferred_element_type=jnp.float32)      # (tq, tkv)
            if use_mask:
                s = s + neg
            m_prev = m_ref[h]                                                # (tq, 1)
            m_new = jnp.maximum(m_prev, jnp.max(s, axis=-1, keepdims=True))
            alpha = jnp.exp(m_prev - m_new)
            p = jnp.exp(s - m_new)
            l_ref[h] = alpha * l_ref[h] + jnp.sum(p, axis=-1, keepdims=True)
            pv = jax.lax.dot_general(p.astype(v.dtype), v[:, sl], (((1,), (0,)), ((), ())),
                                     preferred_element_type=jnp.float32)     # (tq, Dh)
            acc_ref[:, sl] = alpha * acc_ref[:, sl] + pv
            m_ref[h] = m_new

    if causal:
        needs_mask = ki * tkv + tkv - 1 > qi * tq
        in_future = ki * tkv > qi * tq + tq - 1

        @pl.when(jnp.logical_not(needs_mask))
        def _():
            compute(False)

        @pl.when(needs_mask & jnp.logical_not(in_future))
        def _():
            compute(True)
    else:
        compute(False)

    @pl.when(ki == pl.num_programs(2) - 1)
    def _():
        # Exact divide: runs once per (b, q-block), off the hot kv loop.
        for h in range(num_heads):
            sl = slice(h * head_dim, (h + 1) * head_dim)
            o_ref[0, :, sl] = (acc_ref[:, sl] / l_ref[h]).astype(o_ref.dtype)


def _attn_tiles(sq, skv, d):
    """Pick q/kv tiles, auto-shrinking so double-buffered blocks + f32 acc fit the VMEM budget."""
    target = ATTN_TILE_TARGET
    while True:
        tq = _pick_tile(sq, target, 8)
        tkv = _pick_tile(skv, target, 8)
        foot = (2 * 2 * (tq + 2 * tkv) * d    # bf16 q/k/v, double-buffered
                + 2 * 2 * tq * d              # bf16 out, double-buffered
                + 4 * tq * d)                 # f32 accumulator
        if foot <= VMEM_LIMIT_BYTES // 2 or target <= 64:
            return tq, tkv
        target //= 2


def attention(q, k, v, num_heads, causal):
    """q/k/v: (B, S, D) bf16 (heads packed along the lane dim). Returns (B, Sq, D) bf16."""
    B, Sq, D = q.shape
    Skv = k.shape[1]
    assert D % num_heads == 0
    Dh = D // num_heads
    tq, tkv = _attn_tiles(Sq, Skv, D)
    grid = (B, Sq // tq, Skv // tkv)

    if causal:
        # Clamp the kv block index so causally-skipped blocks repeat the previous block
        # index => no new DMA for future K/V tiles.
        def kv_map(b, qi, ki):
            return (b, jnp.minimum(ki, (qi * tq + tq - 1) // tkv), 0)
    else:
        def kv_map(b, qi, ki):
            return (b, ki, 0)

    kernel = functools.partial(_flash_attn_kernel, num_heads=num_heads, head_dim=Dh,
                               causal=causal, tq=tq, tkv=tkv)
    return pl.pallas_call(
        kernel,
        out_shape=jax.ShapeDtypeStruct((B, Sq, D), jnp.bfloat16),
        grid=grid,
        in_specs=[
            pl.BlockSpec((1, tq, D), lambda b, qi, ki: (b, qi, 0)),
            pl.BlockSpec((1, tkv, D), kv_map),
            pl.BlockSpec((1, tkv, D), kv_map),
        ],
        out_specs=pl.BlockSpec((1, tq, D), lambda b, qi, ki: (b, qi, 0)),
        scratch_shapes=[
            pltpu.VMEM((num_heads, tq, 1), jnp.float32),   # running max (per head)
            pltpu.VMEM((num_heads, tq, 1), jnp.float32),   # running sum (per head)
            pltpu.VMEM((tq, D), jnp.float32),              # output accumulator, lane-dense
        ],
        compiler_params=pltpu.CompilerParams(
            dimension_semantics=("parallel", "parallel", "arbitrary"),
            vmem_limit_bytes=VMEM_LIMIT_BYTES),
    )(q, k, v)


# -----------------------------------------------------------------------------
# Model glue (reshapes / parameter plumbing in plain JAX)
# -----------------------------------------------------------------------------
def sinusoidal_pe(seq_len, d):
    position = jnp.arange(seq_len, dtype=jnp.float32)[:, None]
    div_term = jnp.exp(jnp.arange(0, d, 2, dtype=jnp.float32) * (-math.log(10000.0) / d))
    pe = jnp.zeros((seq_len, d), dtype=jnp.float32)
    pe = pe.at[:, 0::2].set(jnp.sin(position * div_term))
    pe = pe.at[:, 1::2].set(jnp.cos(position * div_term))
    return pe


def prepare_params(params, cfg):
    """One-time re-layout (call once, outside the forward): pre-transpose weights to (K, N),
    cast weights to bf16 for the MXU, fold 1/sqrt(Dh) into the Q projection, fuse QKV,
    and pad the vocab dim to a multiple of 128 so logits stores are lane-dense."""
    D, V, H = cfg["embed"], cfg["vocab"], cfg["heads"]
    Dh = D // H
    scale = 1.0 / math.sqrt(Dh)
    Vp = _round_up(V, 128)
    bf16 = jnp.bfloat16
    pp = {
        "embedding": params["embedding"],
        "pe": params["pe"],
        "fc_w": jnp.pad(params["fc_w"].T, ((0, 0), (0, Vp - V))).astype(bf16),  # (D, Vp)
        "fc_b": jnp.pad(params["fc_b"], (0, Vp - V)),
        "layers": [],
    }
    for lp in params["layers"]:
        prepped = {
            "lin1_w": lp["lin1_w"].T.astype(bf16), "lin1_b": lp["lin1_b"],   # (D, F)
            "lin2_w": lp["lin2_w"].T.astype(bf16), "lin2_b": lp["lin2_b"],   # (F, D)
            "n1_g": lp["n1_g"], "n1_b": lp["n1_b"],
            "n2_g": lp["n2_g"], "n2_b": lp["n2_b"],
            "n3_g": lp["n3_g"], "n3_b": lp["n3_b"],
        }
        for name in ("self_attn", "cross_attn"):
            ap = lp[name]
            w = ap["in_w"].T                       # (D, 3D): [:, :D]=Q, [:, D:2D]=K, [:, 2D:]=V
            b = ap["in_b"]
            w = w.at[:, :D].multiply(scale)        # fold softmax scale into the Q projection
            b = b.at[:D].multiply(scale)
            prepped[name] = {
                "qkv_w": w.astype(bf16), "qkv_b": b,            # fused, self-attention
                "q_w": w[:, :D].astype(bf16), "q_b": b[:D],     # cross-attention query
                "kv_w": w[:, D:].astype(bf16), "kv_b": b[D:],   # fused K/V, cross-attention
                "out_w": ap["out_w"].T.astype(bf16), "out_b": ap["out_b"],
            }
        pp["layers"].append(prepped)
    return pp


def mha(query, key_value, p, num_heads, causal, is_self):
    """Projections + flash attention in bf16 (B, S, D) layout (no head split/merge transposes).
    Returns (B*S, D); the out-projection is fused into the add&norm kernel by the caller."""
    B, S, D = query.shape
    q2 = query.reshape(B * S, D)
    if is_self:
        qkv = linear(q2, p["qkv_w"], p["qkv_b"])                # one fused (M, 3D) matmul
        q = qkv[:, :D].reshape(B, S, D)
        k = qkv[:, D:2 * D].reshape(B, S, D)
        v = qkv[:, 2 * D:].reshape(B, S, D)
    else:
        Skv = key_value.shape[1]
        kv2 = key_value.reshape(B * Skv, D)
        q = linear(q2, p["q_w"], p["q_b"]).reshape(B, S, D)
        kv = linear(kv2, p["kv_w"], p["kv_b"])                  # fused (M, 2D) K/V matmul
        k = kv[:, :D].reshape(B, Skv, D)
        v = kv[:, D:].reshape(B, Skv, D)
    o = attention(q, k, v, num_heads, causal)                   # (B, S, D) bf16, lane-dense
    return o.reshape(B * S, D)


def music_transformer_forward(tokens, pp, cfg):
    """Forward pass. `pp` must come from prepare_params() (prepare once, reuse)."""
    B, S = tokens.shape
    D, H, V = cfg["embed"], cfg["heads"], cfg["vocab"]

    # Embedding gather + absolute positional encoding (glue; no matmul hot path).
    # dropout: identity (eval-mode semantics).
    h = (pp["embedding"][tokens] + pp["pe"][:S][None, :, :]).astype(jnp.bfloat16)
    memory = h

    for lp in pp["layers"]:
        h2d = h.reshape(B * S, D)
        # 1) masked self-attention; out-proj + residual + LayerNorm fused in one kernel.
        sa = mha(h, h, lp["self_attn"], H, causal=True, is_self=True)
        h2d = linear_add_layernorm(sa, lp["self_attn"]["out_w"], lp["self_attn"]["out_b"],
                                   h2d, lp["n1_g"], lp["n1_b"])
        h = h2d.reshape(B, S, D)
        # 2) cross-attention over memory (no mask); same fused epilogue.
        ca = mha(h, memory, lp["cross_attn"], H, causal=False, is_self=False)
        h2d = linear_add_layernorm(ca, lp["cross_attn"]["out_w"], lp["cross_attn"]["out_b"],
                                   h2d, lp["n2_g"], lp["n2_b"])
        # 3) feed-forward: Linear+ReLU, then Linear + residual + LayerNorm fused.
        ff = linear(h2d, lp["lin1_w"], lp["lin1_b"], activation="relu")
        h2d = linear_add_layernorm(ff, lp["lin2_w"], lp["lin2_b"],
                                   h2d, lp["n3_g"], lp["n3_b"])
        h = h2d.reshape(B, S, D)

    logits = linear(h.reshape(B * S, D), pp["fc_w"], pp["fc_b"], out_dtype=jnp.float32)
    return logits[:, :V].reshape(B, S, V)


# -----------------------------------------------------------------------------
# Pure-JAX f32 reference (for correctness checking)
# -----------------------------------------------------------------------------
def causal_mask(s):
    upper = jnp.triu(jnp.ones((s, s), dtype=jnp.float32), k=1)
    return jnp.where(upper == 1.0, jnp.float32(-1e30), jnp.float32(0.0))


def _ref_ln(x, g, b, eps=1e-5):
    mu = x.mean(-1, keepdims=True)
    var = ((x - mu) ** 2).mean(-1, keepdims=True)
    return (x - mu) / jnp.sqrt(var + eps) * g + b


def _ref_mha(q_in, kv_in, p, H, mask):
    B, S, D = q_in.shape
    Skv = kv_in.shape[1]
    Dh = D // H
    q = q_in @ p["in_w"][:D].T + p["in_b"][:D]
    k = kv_in @ p["in_w"][D:2 * D].T + p["in_b"][D:2 * D]
    v = kv_in @ p["in_w"][2 * D:].T + p["in_b"][2 * D:]
    sh = lambda t, L: t.reshape(B, L, H, Dh).transpose(0, 2, 1, 3)
    qh, kh, vh = sh(q, S), sh(k, Skv), sh(v, Skv)
    s = jnp.einsum("bhqd,bhkd->bhqk", qh, kh) / math.sqrt(Dh) + mask
    pr = jax.nn.softmax(s, axis=-1)
    o = jnp.einsum("bhqk,bhkd->bhqd", pr, vh).transpose(0, 2, 1, 3).reshape(B, S, D)
    return o @ p["out_w"].T + p["out_b"]


def ref_forward(tokens, params, cfg):
    B, S = tokens.shape
    D, H = cfg["embed"], cfg["heads"]
    h = params["embedding"][tokens] + params["pe"][:S][None, :, :]
    memory = h
    mask = causal_mask(S)
    no_mask = jnp.zeros((S, S), dtype=jnp.float32)
    for lp in params["layers"]:
        h = _ref_ln(h + _ref_mha(h, h, lp["self_attn"], H, mask), lp["n1_g"], lp["n1_b"])
        h = _ref_ln(h + _ref_mha(h, memory, lp["cross_attn"], H, no_mask), lp["n2_g"], lp["n2_b"])
        ff = jnp.maximum(h @ lp["lin1_w"].T + lp["lin1_b"], 0.0) @ lp["lin2_w"].T + lp["lin2_b"]
        h = _ref_ln(h + ff, lp["n3_g"], lp["n3_b"])
    return h @ params["fc_w"].T + params["fc_b"]


# -----------------------------------------------------------------------------
# Deterministic parameter init (torch-style layouts; kernel layouts come from prepare_params)
# -----------------------------------------------------------------------------
def init_params(key, cfg):
    V, D, L, F, Smax = (cfg["vocab"], cfg["embed"], cfg["layers"],
                        cfg["hidden"], cfg["max_seq"])
    kstate = [key]

    def w(shape):
        kstate[0], sub = jax.random.split(kstate[0])
        return (0.02 * jax.random.normal(sub, shape)).astype(jnp.float32)

    def attn():
        return {"in_w": w((3 * D, D)), "in_b": w((3 * D,)),
                "out_w": w((D, D)), "out_b": w((D,))}

    layers = []
    for _ in range(L):
        layers.append({
            "self_attn": attn(),
            "cross_attn": attn(),
            "lin1_w": w((F, D)), "lin1_b": w((F,)),
            "lin2_w": w((D, F)), "lin2_b": w((D,)),
            "n1_g": jnp.ones((D,), jnp.float32), "n1_b": jnp.zeros((D,), jnp.float32),
            "n2_g": jnp.ones((D,), jnp.float32), "n2_b": jnp.zeros((D,), jnp.float32),
            "n3_g": jnp.ones((D,), jnp.float32), "n3_b": jnp.zeros((D,), jnp.float32),
        })

    return {
        "embedding": w((V, D)),
        "pe": sinusoidal_pe(Smax, D),
        "layers": layers,
        "fc_w": w((V, D)),
        "fc_b": w((V,)),
    }


# -----------------------------------------------------------------------------
if __name__ == "__main__":
    cfg = dict(vocab=64, embed=32, heads=4, layers=2, hidden=64, max_seq=16)
    B, S = 2, 8

    root = jax.random.PRNGKey(0)
    k_tok, k_par = jax.random.split(root)
    tokens = jax.random.randint(k_tok, (B, S), 0, cfg["vocab"], dtype=jnp.int32)
    params = init_params(k_par, cfg)

    # Hoisted out of the forward: prepare the kernel-layout (bf16, pre-transposed) params once.
    pp = prepare_params(params, cfg)

    out = music_transformer_forward(tokens, pp, cfg)
    out = jax.block_until_ready(out)
    assert out.shape == (B, S, cfg["vocab"]), out.shape

    ref = jax.block_until_ready(ref_forward(tokens, params, cfg))
    assert bool(jnp.all(jnp.isfinite(out)))
    # Tolerance accounts for bf16 MXU operands and bf16 inter-kernel activations.
    assert jnp.allclose(out, ref, atol=1e-2, rtol=1e-2), float(jnp.max(jnp.abs(out - ref)))

    print("KERNEL_OK")
</pallas_src>

<mosaic_0001>
module attributes {stable_mosaic.version = 11 : i64} {
  func.func @_matmul_kernel(%arg0: i32, %arg1: i32, %arg2: i32, %arg3: memref<16x32xbf16, #tpu.memory_space<vmem>>, %arg4: memref<32x96xbf16, #tpu.memory_space<vmem>>, %arg5: memref<1x96xf32, #tpu.memory_space<vmem>>, %arg6: memref<16x96xbf16, #tpu.memory_space<vmem>>, %arg7: memref<16x96xf32, #tpu.memory_space<vmem>>) attributes {dimension_semantics = [#tpu.dimension_semantics<parallel>, #tpu.dimension_semantics<parallel>, #tpu.dimension_semantics<arbitrary>], iteration_bounds = array<i64: 1, 1, 1>, scalar_prefetch = 0 : i64, scratch_operands = 1 : i64, tpu.core_type = #tpu.core_type<tc>, window_params = [{transform_indices = @transform_0, window_bounds = array<i64: 16, 32>}, {transform_indices = @transform_1, window_bounds = array<i64: 32, 96>}, {transform_indices = @transform_2, window_bounds = array<i64: 1, 96>}, {transform_indices = @transform_3, window_bounds = array<i64: 16, 96>}]} {
    %c0_i32 = arith.constant 0 : i32
    %0 = arith.cmpi eq, %arg2, %c0_i32 : i32
    %1 = arith.extui %0 : i1 to i32
    %c0_i32_0 = arith.constant 0 : i32
    %2 = arith.cmpi ne, %1, %c0_i32_0 : i32
    scf.if %2 {
      %cst_10 = arith.constant 0.000000e+00 : f32
      %12 = vector.broadcast %cst_10 : f32 to vector<16x96xf32>
      %c0_11 = arith.constant 0 : index
      %c0_12 = arith.constant 0 : index
      %13 = vector.load %arg7[%c0_11, %c0_12] : memref<16x96xf32, #tpu.memory_space<vmem>>, vector<16x96xf32>
      tpu.vector_store %arg7[%c0_11, %c0_12], %12 {strides = array<i32>} : memref<16x96xf32, #tpu.memory_space<vmem>>, vector<16x96xf32>,
    } else {
    }
    %c0 = arith.constant 0 : index
    %c0_1 = arith.constant 0 : index
    %3 = vector.load %arg7[%c0, %c0_1] : memref<16x96xf32, #tpu.memory_space<vmem>>, vector<16x96xf32>
    %c0_2 = arith.constant 0 : index
    %c0_3 = arith.constant 0 : index
    %4 = vector.load %arg3[%c0_2, %c0_3] : memref<16x32xbf16, #tpu.memory_space<vmem>>, vector<16x32xbf16>
    %c0_4 = arith.constant 0 : index
    %c0_5 = arith.constant 0 : index
    %5 = vector.load %arg4[%c0_4, %c0_5] : memref<32x96xbf16, #tpu.memory_space<vmem>>, vector<32x96xbf16>
    %cst = arith.constant dense<0.000000e+00> : vector<16x96xf32>
    %6 = tpu.matmul %4, %5, %cst {dimension_numbers = #tpu.dot_dimension_numbers<[1], [0], [0], [1], [0, 0, 1, 1], [], []>} : vector<16x32xbf16>, vector<32x96xbf16>, vector<16x96xf32> -> vector<16x96xf32>
    %7 = arith.addf %3, %6 : vector<16x96xf32>
    %c0_6 = arith.constant 0 : index
    %c0_7 = arith.constant 0 : index
    %8 = vector.load %arg7[%c0_6, %c0_7] : memref<16x96xf32, #tpu.memory_space<vmem>>, vector<16x96xf32>
    tpu.vector_store %arg7[%c0_6, %c0_7], %7 {strides = array<i32>} : memref<16x96xf32, #tpu.memory_space<vmem>>, vector<16x96xf32>,
    %c0_i32_8 = arith.constant 0 : i32
    %9 = arith.cmpi eq, %arg2, %c0_i32_8 : i32
    %10 = arith.extui %9 : i1 to i32
    %c0_i32_9 = arith.constant 0 : i32
    %11 = arith.cmpi ne, %10, %c0_i32_9 : i32
    scf.if %11 {
      %c0_10 = arith.constant 0 : index
      %c0_11 = arith.constant 0 : index
      %12 = vector.load %arg7[%c0_10, %c0_11] : memref<16x96xf32, #tpu.memory_space<vmem>>, vector<16x96xf32>
      %c0_12 = arith.constant 0 : index
      %c0_13 = arith.constant 0 : index
      %13 = vector.load %arg5[%c0_12, %c0_13] : memref<1x96xf32, #tpu.memory_space<vmem>>, vector<1x96xf32>
      %14 = vector.broadcast %13 : vector<1x96xf32> to vector<16x96xf32>
      %15 = arith.addf %12, %14 : vector<16x96xf32>
      %16 = arith.truncf %15 : vector<16x96xf32> to vector<16x96xbf16>
      %c0_14 = arith.constant 0 : index
      %c0_15 = arith.constant 0 : index
      %17 = vector.load %arg6[%c0_14, %c0_15] : memref<16x96xbf16, #tpu.memory_space<vmem>>, vector<16x96xbf16>
      tpu.vector_store %arg6[%c0_14, %c0_15], %16 {strides = array<i32>} : memref<16x96xbf16, #tpu.memory_space<vmem>>, vector<16x96xbf16>,
    } else {
    }
    return
  }
  func.func @transform_0(%arg0: i32, %arg1: i32, %arg2: i32) -> (i32, i32) {
    %c0_i32 = arith.constant 0 : i32
    return %arg0, %arg2 : i32, i32
  }
  func.func @transform_1(%arg0: i32, %arg1: i32, %arg2: i32) -> (i32, i32) {
    %c0_i32 = arith.constant 0 : i32
    return %arg2, %arg1 : i32, i32
  }
  func.func @transform_2(%arg0: i32, %arg1: i32, %arg2: i32) -> (i32, i32) {
    %c0_i32 = arith.constant 0 : i32
    %c0_i32_0 = arith.constant 0 : i32
    return %c0_i32, %arg1 : i32, i32
  }
  func.func @transform_3(%arg0: i32, %arg1: i32, %arg2: i32) -> (i32, i32) {
    %c0_i32 = arith.constant 0 : i32
    return %arg0, %arg1 : i32, i32
  }
}

</mosaic_0001>

<llo_original>
// kernel: tpu_custom_call.1
$region0: #{tpu_custom_call.1}
  #allocation0 [shape = 'u32[]', space=smem, size = 0x4, offset = 0x4, fixed_abs, tag = 'smem constant byte address 0x4 - core index']
  #allocation1 [shape = 'u32[144,128]{1,0:T(1,128)}', space=vmem, size = 0x12000, scoped, tag = 'internal scratch']
  #allocation2 [shape = 'f32[16,96]{1,0:T(8,128)}', space=vmem, size = 0x2000, scoped, tag = 'scratch operand']
  %s0 = inlined_call_operand.hbm [shape: bf16[16,32], index: 0, kind: input, shape index: {}]
  %s1 = inlined_call_operand.hbm [shape: bf16[32,96], index: 1, kind: input, shape index: {}]
  %s2 = inlined_call_operand.vmem [shape: f32[1,96], index: 2, kind: input, shape index: {}]
  %s3 = inlined_call_operand.hbm [shape: bf16[16,96], index: 3, kind: output, shape index: {}]
  %s4 = sld [smem:[#allocation0]]
  $region38: #{tpu_custom_call.1} parent=0
    _
  %s6 = ssub.s32 1, %s4
  %s7 = scalar_select 0, %s6, %s4
  $region1: #{tpu_custom_call.1} parent=0
    #allocation3 [shape = 'u8[4096]{0}', space=vmem, size = 0x1000, scoped, tag = 'input window, operand 0, single buffered']
    #allocation4 [shape = 's32[1]{0}', space=sflag, size = 0x4, scoped, tag = 'scoped memory for tpu_custom_call.1']
    #allocation5 [shape = 's32[1]{0}', space=sflag, size = 0x4, scoped, tag = 'scoped memory for tpu_custom_call.1']
    #allocation6 [shape = 'u8[8192]{0}', space=vmem, size = 0x2000, scoped, tag = 'input window, operand 1, single buffered']
    #allocation7 [shape = 's32[1]{0}', space=sflag, size = 0x4, scoped, tag = 'scoped memory for tpu_custom_call.1']
    #allocation8 [shape = 'u8[4096]{0}', space=vmem, size = 0x1000, scoped, tag = 'output window, operand 0, single buffered']
    %8 = vsyncpa [#allocation4], 0
    %9 = vsyncpa [#allocation7], 0
    %10 = vsyncpa [#allocation5], 0
    // Predicated region
    $region2: #{tpu_custom_call.1} parent=1 // pred_check
      _
    $region3: #{tpu_custom_call.1} parent=1 // pred_check_branch
      %12 = sbr.rel (0) target = $region5
    $region4: #{tpu_custom_call.1} parent=1 // pred_region
      %s14 = ssub.s32 128, 128
      %15 = vsyncadd [#allocation4], %s14
      %s16 = sshll.u32 [#allocation3], 4
      %s17 = int_to_ptr.vmem [resolvable:$true] %s16
      %22 = dma.hbm_to_vmem [thread:$0]  %s0, 128, %s17, [#allocation4], 64, 64, 4
    $region5: #{tpu_custom_call.1} parent=1 // pred_fallthru
      _
    // Predicated region
    $region6: #{tpu_custom_call.1} parent=1 // pred_check
      _
    $region7: #{tpu_custom_call.1} parent=1 // pred_check_branch
      %24 = sbr.rel (0) target = $region9
    $region8: #{tpu_custom_call.1} parent=1 // pred_region
      %s26 = ssub.s32 256, 256
      %27 = vsyncadd [#allocation7], %s26
      %s28 = sshll.u32 [#allocation6], 4
      %s29 = int_to_ptr.vmem [resolvable:$true] %s28
      %34 = dma.hbm_to_vmem [thread:$0]  %s1, 256, %s29, [#allocation7], 64, 64, 4
    $region9: #{tpu_custom_call.1} parent=1 // pred_fallthru
      _
    // Predicated region
    $region10: #{tpu_custom_call.1} parent=1 // pred_check
      _
    $region11: #{tpu_custom_call.1} parent=1 // pred_check_branch
      %36 = sbr.rel (0) target = $region13
    $region12: #{tpu_custom_call.1} parent=1 // pred_region
      _
    $region13: #{tpu_custom_call.1} parent=1 // pred_fallthru
      _
    // Predicated region
    $region14: #{tpu_custom_call.1} parent=1 // pred_check
      _
    $region15: #{tpu_custom_call.1} parent=1 // pred_check_branch
      %38 = sbr.rel (0) target = $region17
    $region16: #{tpu_custom_call.1} parent=1 // pred_region
      %39 = dma.done [#allocation4], 128
    $region17: #{tpu_custom_call.1} parent=1 // pred_fallthru
      _
    // Predicated region
    $region18: #{tpu_custom_call.1} parent=1 // pred_check
      _
    $region19: #{tpu_custom_call.1} parent=1 // pred_check_branch
      %41 = sbr.rel (0) target = $region21
    $region20: #{tpu_custom_call.1} parent=1 // pred_region
      %42 = dma.done [#allocation7], 256
    $region21: #{tpu_custom_call.1} parent=1 // pred_fallthru
      _
    %p44 = scmp.eq.s32.totalorder 0, 0
    // Predicated region
    $region22: #{tpu_custom_call.1} parent=1 // pred_check
      %p45 = pneg %p44
    $region23: #{tpu_custom_call.1} parent=1 // pred_check_branch
      %47 = sbr.rel (%p45) target = $region25
    $region24: #{tpu_custom_call.1} parent=1 // pred_region
      %vm48 = vcmask 785408
      %49 = vst.msk [vmem:[#allocation2] sm:$0xff] %vm48, 0.0
      %50 = vst.msk [vmem:[#allocation2 + $0x8] sm:$0xff] %vm48, 0.0
    $region25: #{tpu_custom_call.1} parent=1 // pred_fallthru
      _
    %v51 = vld [vmem:[#allocation2] sm:$0xff]
    %v52 = vld [vmem:[#allocation2 + $0x8] sm:$0xff]
    %v53 = vld [vmem:[#allocation3] sm:$0xf]
    %v54 = vld [vmem:[#allocation3 + $0x4] sm:$0xf]
    %v55 = vld [vmem:[#allocation6] sm:$0xf]
    %v56 = vld [vmem:[#allocation6 + $0x4] sm:$0xf]
    %v57 = vld [vmem:[#allocation6 + $0x8] sm:$0xf]
    %v58 = vld [vmem:[#allocation6 + $0xc] sm:$0xf]
    %v61 = vunpack.c.l.b16 %v53
    %v62 = vunpack.c.l.b16 %v54
    %v63 = vpack.c.b16 %v62, %v61
    %v68 = vunpack.c.l.b16 %v55
    %v69 = vunpack.c.l.b16 %v56
    %v70 = vunpack.c.l.b16 %v57
    %v71 = vunpack.c.l.b16 %v58
    %v72 = vpack.c.b16 %v69, %v68
    %v73 = vpack.c.b16 %v71, %v70
    %vm76 = vcmask 261120
    %v78 = vsel %vm76, %v63, 0
    %80 = vmatprep.subr.bf16.mxu0 0
    %81 = vmatpush1.bf16.msra.mxu0 %v72
    %82 = vmatprep.subr.bf16.mxu0 0
    %83 = vmatpush1.bf16.msra.mxu0 %v73
    %84 = vmatprep.subr.bf16.mxu0 0
    %85 = vmatpush1.bf16.msra.mxu0 0
    %86 = vmatprep.subr.bf16.mxu0 0
    %87 = vmatpush1.bf16.msra.mxu0 0
    %88 = vmatprep.subr.bf16.mxu0 0
    %89 = vmatpush1.bf16.msra.mxu0 0
    %90 = vmatprep.subr.bf16.mxu0 0
    %91 = vmatpush1.bf16.msra.mxu0 0
    %92 = vmatprep.subr.bf16.mxu0 0
    %93 = vmatpush1.bf16.msra.mxu0 0
    %94 = vmatprep.subr.bf16.mxu0 0
    %95 = vmatpush1.bf16.msra.mxu0 0
    %96 = vmatprep.subr.bf16.mxu0 0
    %97 = vmatpush1.bf16.msra.mxu0 0
    %98 = vmatprep.subr.bf16.mxu0 0
    %99 = vmatpush1.bf16.msra.mxu0 0
    %100 = vmatprep.subr.bf16.mxu0 0
    %101 = vmatpush1.bf16.msra.mxu0 0
    %102 = vmatprep.subr.bf16.mxu0 0
    %103 = vmatpush1.bf16.msra.mxu0 0
    %104 = vmatprep.subr.bf16.mxu0 0
    %105 = vmatpush1.bf16.msra.mxu0 0
    %106 = vmatprep.subr.bf16.mxu0 0
    %107 = vmatpush1.bf16.msra.mxu0 0
    %108 = vmatprep.subr.bf16.mxu0 0
    %109 = vmatpush1.bf16.msra.mxu0 0
    %110 = vmatprep.subr.bf16.mxu0 0
    %111 = vmatpush1.bf16.msra.mxu0 0
    %112 = vmatprep.mubr.bf16.mxu0 0
    %113 = vmatmul.mubr.bf16.gmra.mrb[0].mxu0 %v78
    %v114 = vpop.f32.mrb[0].mxu0
    %v115 = vadd.f32 0.0, %v114
    %v116 = vpop.f32.mrb[0].mxu0
    %v117 = vpop.f32.mrb[0].mxu0
    %v118 = vadd.f32 0.0, %v117
    %v119 = vpop.f32.mrb[0].mxu0
    %120 = vdwg.mxu0
    %v121 = vadd.f32 %v51, %v115
    %v122 = vadd.f32 %v52, %v118
    %vm123 = vcmask 785408
    %124 = vst.msk [vmem:[#allocation2] sm:$0xff] %vm123, %v121
    %125 = vst.msk [vmem:[#allocation2 + $0x8] sm:$0xff] %vm123, %v122
    // Predicated region
    $region26: #{tpu_custom_call.1} parent=1 // pred_check
      %p126 = pneg %p44
    $region27: #{tpu_custom_call.1} parent=1 // pred_check_branch
      %128 = sbr.rel (%p126) target = $region29
    $region28: #{tpu_custom_call.1} parent=1 // pred_region
      %v129 = vld [vmem:[#allocation2] sm:$0xff]
      %v130 = vld [vmem:[#allocation2 + $0x8] sm:$0xff]
      %v131 = vld [vmem:[%s2] sm:$0x1]
      %v133 = vlaneseq
      %v134 = vshrl.u32 %v133, 7
      %v135 = vsub.s32 0, %v134
      %v136 = vrot.slane %v131, %v135
      %v138 = vadd.f32 %v129, %v136
      %v139 = vadd.f32 %v130, %v136
      %v140 = vpack.c.bf16 %v139, %v138
      %v142 = vunpack.c.l.b16 %v140
      %v143 = vunpack.c.h.b16 %v140
      %v144 = vpack.c.b16 %v142, %v142
      %v145 = vpack.c.b16 %v143, %v143
      %vm148 = vcmask 781312
      %149 = vst.msk [vmem:[#allocation8] sm:$0xf] %vm148, %v144
      %150 = vst.msk [vmem:[#allocation8 + $0x4] sm:$0xf] %vm148, %v145
    $region29: #{tpu_custom_call.1} parent=1 // pred_fallthru
      _
    // Predicated region
    $region30: #{tpu_custom_call.1} parent=1 // pred_check
      _
    $region31: #{tpu_custom_call.1} parent=1 // pred_check_branch
      %152 = sbr.rel (0) target = $region33
    $region32: #{tpu_custom_call.1} parent=1 // pred_region
      %s154 = ssub.s32 128, 128
      %155 = vsyncadd [#allocation5], %s154
      %s156 = sshll.u32 [#allocation8], 4
      %s157 = int_to_ptr.vmem [resolvable:$true] %s156
      %162 = dma.vmem_to_hbm [thread:$0]  %s157, 128, %s3, [#allocation5], 64, 64, 4
    $region33: #{tpu_custom_call.1} parent=1 // pred_fallthru
      _
    // Predicated region
    $region34: #{tpu_custom_call.1} parent=1 // pred_check
      _
    $region35: #{tpu_custom_call.1} parent=1 // pred_check_branch
      %164 = sbr.rel (0) target = $region37
    $region36: #{tpu_custom_call.1} parent=1 // pred_region
      %165 = dma.done [#allocation5], 128
    $region37: #{tpu_custom_call.1} parent=1 // pred_fallthru
      _
    %166 = vsyncpa [#allocation4], 1
    %167 = vsyncpa [#allocation7], 1
    %168 = vsyncpa [#allocation5], 1

</llo_original>
